<compile_context>
chip_gen: v7x
topology: tpu7x:2x2x1
jax: 0.10.0
libtpu: 0.0.40
codegen_flags: <defaults>
</compile_context>

<pallas_src>
import numpy as np
import jax
import jax.numpy as jnp
from jax import lax
from jax.experimental import pallas as pl
from jax.experimental.pallas import tpu as pltpu


_NEG_BIG = -1e30  # finite "-inf": exp underflows to 0, no inf-inf NaN


def precompute_pos_neg_masks(effective_batch_size: int,
                             world_size: int = 1,
                             rank: int = 0,
                             num_pos: int = 2):
    """Exact numpy replica of SimclrInfoNCECriterion.precompute_pos_neg_mask.

    Only used by the pure-JAX reference to validate the analytic in-kernel masks.
    """
    total_images = effective_batch_size
    batch_size = total_images // world_size
    orig_images = batch_size // num_pos

    pos_mask = np.zeros((batch_size, total_images), dtype=np.float32)
    neg_mask = np.zeros((batch_size, total_images), dtype=np.float32)

    all_indices = np.arange(total_images)
    pos_members = orig_images * np.arange(num_pos)
    orig_members = np.arange(orig_images)
    for anchor in np.arange(num_pos):
        for img_idx in range(orig_images):
            delete_inds = batch_size * rank + img_idx + pos_members
            neg_inds = np.delete(all_indices, delete_inds)
            neg_mask[anchor * orig_images + img_idx, neg_inds] = 1.0
        for pos in np.delete(np.arange(num_pos), anchor):
            pos_inds = batch_size * rank + pos * orig_images + orig_members
            rows = np.arange(anchor * orig_images, (anchor + 1) * orig_images)
            pos_mask[rows, pos_inds] = 1.0
    return pos_mask, neg_mask


def _make_kernel(tm: int, tn: int, inv_T: float, dot_dtype):
    """Builds the tiled online-LSE kernel body (denominator only)."""

    def kernel(q_ref, k_ref, out_ref, qs_sc, m_sc, s_sc):
        i = pl.program_id(0)            # row-tile index   ("parallel")
        j = pl.program_id(1)            # column-tile index ("arbitrary" / reduction)

        @pl.when(j == 0)
        def _init():
            # Hoisted out of the j loop: scale the resident q block by 1/T once
            # (fold into q: O(TM*D) instead of scaling logits O(TM*TN) per step).
            qs_sc[...] = (q_ref[...].astype(jnp.float32) * inv_T).astype(dot_dtype)
            m_sc[...] = jnp.full_like(m_sc, _NEG_BIG)
            s_sc[...] = jnp.zeros_like(s_sc)

        # Contract both operands on D — no explicit transpose / relayout.
        logits = lax.dot_general(
            qs_sc[...], k_ref[...],
            dimension_numbers=(((1,), (1,)), ((), ())),
            preferred_element_type=jnp.float32)                # [TM, TN] f32

        row_start = i * tm
        col_start = j * tn
        # Only the column tile(s) overlapping the row range contain self columns.
        has_diag = jnp.logical_and(row_start < col_start + tn,
                                   col_start < row_start + tm)

        def lse_update(vals):
            # Online log-sum-exp over all non-self columns == log(pos + neg).
            m_tile = jnp.max(vals, axis=1, keepdims=True)
            m_new = jnp.maximum(m_sc[...], m_tile)
            alpha = jnp.exp(m_sc[...] - m_new)
            s_sc[...] = alpha * s_sc[...] + jnp.sum(jnp.exp(vals - m_new),
                                                    axis=1, keepdims=True)
            m_sc[...] = m_new

        @pl.when(has_diag)
        def _masked_update():
            # Analytic self-mask (world_size=1, rank=0): mask the diagonal column.
            row_ids = row_start + lax.broadcasted_iota(jnp.int32, (tm, tn), 0)
            col_ids = col_start + lax.broadcasted_iota(jnp.int32, (tm, tn), 1)
            lse_update(jnp.where(col_ids == row_ids, _NEG_BIG, logits))

        @pl.when(jnp.logical_not(has_diag))
        def _plain_update():
            # Steady-state path: no iota / compare / select at all.
            lse_update(logits)

        @pl.when(j == pl.num_programs(1) - 1)
        def _finalize():
            # log(pos + neg) = m + log(sum_{c != self} exp(l_c - m))
            out_ref[...] = m_sc[...] + jnp.log(s_sc[...])

    return kernel


def _pick_tile(n: int, preferred: int, multiple: int) -> int:
    """Largest tile <= preferred that divides n and is a multiple of `multiple`.
    Falls back to the full dimension (always a legal block)."""
    if n <= preferred:
        return n
    t = (preferred // multiple) * multiple
    while t >= multiple:
        if n % t == 0:
            return t
        t -= multiple
    return n


def simclr_info_nce_loss(embedding: jax.Array,
                         temperature: float,
                         *,
                         num_pos: int = 2,
                         block_m: int = 512,
                         block_n: int = 512,
                         dot_dtype=jnp.bfloat16) -> jax.Array:
    """embedding: [B, D] -> scalar SimCLR InfoNCE loss (world_size=1, rank=0)."""
    B, D = embedding.shape
    assert B % num_pos == 0, "Batch size should be divisible by num_pos"
    assert num_pos == 2, "analytic in-kernel masks assume num_pos == 2"
    orig_images = B // num_pos

    # bf16 blocks pack 16 rows per sublane tile; f32 packs 8.
    sub = 16 if jnp.dtype(dot_dtype).itemsize < 4 else 8
    tm = _pick_tile(B, block_m, sub)
    tn = _pick_tile(B, block_n, sub)
    # v7x megacore: the row axis is the only parallel axis, so make sure it has
    # at least 2 tiles when the batch allows it (no-op cost on v5e/v6e).
    if B // tm < 2:
        tm_alt = _pick_tile(B, max(sub, tm // 2), sub)
        if tm_alt < B and B % tm_alt == 0:
            tm = tm_alt
    # (8,128) rule on the second-to-last block dim (or full-dim exception).
    assert tm % sub == 0 or tm == B
    assert tn % sub == 0 or tn == B

    inv_T = 1.0 / float(temperature)
    kernel = _make_kernel(tm, tn, inv_T, dot_dtype)

    # Cast once in HBM so the repeatedly-read key tiles move half the bytes (bf16).
    emb_in = embedding if embedding.dtype == dot_dtype else embedding.astype(dot_dtype)

    itemsize = jnp.dtype(dot_dtype).itemsize
    est = (2 * (tm + tn) * D * itemsize   # double-buffered q/k input tiles
           + tm * D * itemsize            # scaled-q scratch
           + 8 * tm * tn * 4              # logits + mask/exp temporaries (f32)
           + 8 * tm * 4)                  # row accumulators + output block
    try:
        vmem_cap = pltpu.get_tpu_info().vmem_capacity_bytes
    except Exception:
        vmem_cap = 64 * 1024 * 1024       # conservative: v7x per-TC VMEM
    vmem_limit_bytes = int(min(max(2 * est, 16 * 1024 * 1024),
                               int(0.6 * vmem_cap),
                               48 * 1024 * 1024))

    row_lse = pl.pallas_call(
        kernel,
        out_shape=jax.ShapeDtypeStruct((B, 1), jnp.float32),
        grid_spec=pltpu.PrefetchScalarGridSpec(
            num_scalar_prefetch=0,
            grid=(B // tm, B // tn),
            in_specs=[
                pl.BlockSpec((tm, D), lambda i, j: (i, 0)),   # row ("query") tile
                pl.BlockSpec((tn, D), lambda i, j: (j, 0)),   # column ("key") tile
            ],
            out_specs=pl.BlockSpec((tm, 1), lambda i, j: (i, 0)),
            scratch_shapes=[
                pltpu.VMEM((tm, D), dot_dtype),               # scaled q (per row tile)
                pltpu.VMEM((tm, 1), jnp.float32),             # running max m
                pltpu.VMEM((tm, 1), jnp.float32),             # running sum s
            ],
        ),
        compiler_params=pltpu.CompilerParams(
            dimension_semantics=("parallel", "arbitrary"),
            vmem_limit_bytes=vmem_limit_bytes,
        ),
    )(emb_in, emb_in)

    # Positive logit per row: partner(r) = (r + B/2) mod B, exactly one per row,
    # computed as a tiny O(B*D) f32 op outside the kernel (hoisted out of the grid).
    emb_f32 = embedding.astype(jnp.float32)
    l_pos = jnp.sum(emb_f32 * jnp.roll(emb_f32, orig_images, axis=0), axis=1) * inv_T

    # log(pos / (pos + neg)) = l_pos - log_sum_exp_{c != self}(logits)
    log_prob = l_pos - row_lse[:, 0]
    return -jnp.mean(log_prob)


def _reference_loss(embedding, pos_mask, neg_mask, temperature):
    """Pure-JAX replica of SimclrInfoNCECriterion.forward (mask-based)."""
    sim = jnp.exp(jnp.dot(embedding, embedding.T,
                          precision=lax.Precision.HIGHEST) / temperature)
    pos = jnp.sum(sim * pos_mask, axis=1)
    neg = jnp.sum(sim * neg_mask, axis=1)
    return -jnp.mean(jnp.log(pos / (pos + neg)))


def _check(name, got, want, rtol, atol):
    got = np.asarray(jax.block_until_ready(got))
    want = np.asarray(jax.block_until_ready(want))
    assert np.allclose(got, want, rtol=rtol, atol=atol), (
        f"{name}: kernel loss {got} != reference {want}")


if __name__ == "__main__":
    temperature = 0.1
    key = jax.random.PRNGKey(0)
    k1, k2 = jax.random.split(key)

    # ---- Test 1: small single-tile case (B=8 originals x 2 views, D=128) ----
    B1, D1 = 8, 128
    emb1 = jax.random.normal(k1, (B1, D1), dtype=jnp.float32)
    emb1 = emb1 / jnp.linalg.norm(emb1, axis=1, keepdims=True)
    pos1, neg1 = precompute_pos_neg_masks(B1, world_size=1, rank=0, num_pos=2)
    ref1 = _reference_loss(emb1, jnp.asarray(pos1), jnp.asarray(neg1), temperature)

    _check("B=8 f32",
           simclr_info_nce_loss(emb1, temperature, dot_dtype=jnp.float32),
           ref1, rtol=1e-3, atol=1e-4)
    _check("B=8 bf16",
           simclr_info_nce_loss(emb1, temperature),
           ref1, rtol=5e-2, atol=5e-2)

    # ---- Test 2: multi-tile grid (4x4) — exercises diag-tile guard + online LSE ----
    B2, D2 = 64, 128
    emb2 = jax.random.normal(k2, (B2, D2), dtype=jnp.float32)
    emb2 = emb2 / jnp.linalg.norm(emb2, axis=1, keepdims=True)
    pos2, neg2 = precompute_pos_neg_masks(B2, world_size=1, rank=0, num_pos=2)
    ref2 = _reference_loss(emb2, jnp.asarray(pos2), jnp.asarray(neg2), temperature)

    _check("B=64 f32 tiled",
           simclr_info_nce_loss(emb2, temperature, block_m=16, block_n=16,
                                dot_dtype=jnp.float32),
           ref2, rtol=1e-3, atol=1e-4)
    _check("B=64 bf16 tiled",
           simclr_info_nce_loss(emb2, temperature, block_m=16, block_n=16),
           ref2, rtol=5e-2, atol=5e-2)

    print("KERNEL_OK")
</pallas_src>

<mosaic_0001>
module attributes {stable_mosaic.version = 11 : i64} {
  func.func @kernel(%arg0: i32, %arg1: i32, %arg2: memref<8x128xf32, #tpu.memory_space<vmem>>, %arg3: memref<8x128xf32, #tpu.memory_space<vmem>>, %arg4: memref<8x1xf32, #tpu.memory_space<vmem>>, %arg5: memref<8x128xf32, #tpu.memory_space<vmem>>, %arg6: memref<8x1xf32, #tpu.memory_space<vmem>>, %arg7: memref<8x1xf32, #tpu.memory_space<vmem>>) attributes {dimension_semantics = [#tpu.dimension_semantics<parallel>, #tpu.dimension_semantics<arbitrary>], iteration_bounds = array<i64: 1, 1>, scalar_prefetch = 0 : i64, scratch_operands = 3 : i64, tpu.core_type = #tpu.core_type<tc>, window_params = [{transform_indices = @transform_0, window_bounds = array<i64: 8, 128>}, {transform_indices = @transform_1, window_bounds = array<i64: 8, 128>}, {transform_indices = @transform_2, window_bounds = array<i64: 8, 1>}]} {
    %c0_i32 = arith.constant 0 : i32
    %0 = arith.cmpi eq, %arg1, %c0_i32 : i32
    %1 = arith.extui %0 : i1 to i32
    %c0_i32_0 = arith.constant 0 : i32
    %2 = arith.cmpi ne, %1, %c0_i32_0 : i32
    scf.if %2 {
      %c0_11 = arith.constant 0 : index
      %c0_12 = arith.constant 0 : index
      %21 = vector.load %arg2[%c0_11, %c0_12] : memref<8x128xf32, #tpu.memory_space<vmem>>, vector<8x128xf32>
      %cst_13 = arith.constant 1.000000e+01 : f32
      %22 = vector.broadcast %cst_13 : f32 to vector<8x128xf32>
      %23 = arith.mulf %21, %22 : vector<8x128xf32>
      %c0_14 = arith.constant 0 : index
      %c0_15 = arith.constant 0 : index
      %24 = vector.load %arg5[%c0_14, %c0_15] : memref<8x128xf32, #tpu.memory_space<vmem>>, vector<8x128xf32>
      tpu.vector_store %arg5[%c0_14, %c0_15], %23 {strides = array<i32>} : memref<8x128xf32, #tpu.memory_space<vmem>>, vector<8x128xf32>,
      %cst_16 = arith.constant -1.000000e+30 : f32
      %25 = vector.broadcast %cst_16 : f32 to vector<8x1xf32>
      %c0_17 = arith.constant 0 : index
      %c0_18 = arith.constant 0 : index
      %26 = vector.load %arg6[%c0_17, %c0_18] : memref<8x1xf32, #tpu.memory_space<vmem>>, vector<8x1xf32>
      tpu.vector_store %arg6[%c0_17, %c0_18], %25 {strides = array<i32>} : memref<8x1xf32, #tpu.memory_space<vmem>>, vector<8x1xf32>,
      %cst_19 = arith.constant 0.000000e+00 : f32
      %27 = vector.broadcast %cst_19 : f32 to vector<8x1xf32>
      %c0_20 = arith.constant 0 : index
      %c0_21 = arith.constant 0 : index
      %28 = vector.load %arg7[%c0_20, %c0_21] : memref<8x1xf32, #tpu.memory_space<vmem>>, vector<8x1xf32>
      tpu.vector_store %arg7[%c0_20, %c0_21], %27 {strides = array<i32>} : memref<8x1xf32, #tpu.memory_space<vmem>>, vector<8x1xf32>,
    } else {
    }
    %c0 = arith.constant 0 : index
    %c0_1 = arith.constant 0 : index
    %3 = vector.load %arg5[%c0, %c0_1] : memref<8x128xf32, #tpu.memory_space<vmem>>, vector<8x128xf32>
    %c0_2 = arith.constant 0 : index
    %c0_3 = arith.constant 0 : index
    %4 = vector.load %arg3[%c0_2, %c0_3] : memref<8x128xf32, #tpu.memory_space<vmem>>, vector<8x128xf32>
    %cst = arith.constant dense<0.000000e+00> : vector<8x8xf32>
    %5 = tpu.matmul %3, %4, %cst {dimension_numbers = #tpu.dot_dimension_numbers<[1], [1], [0], [0], [0, 0, 1, 0], [], []>} : vector<8x128xf32>, vector<8x128xf32>, vector<8x8xf32> -> vector<8x8xf32>
    %c8_i32 = arith.constant 8 : i32
    %6 = arith.muli %arg0, %c8_i32 : i32
    %c8_i32_4 = arith.constant 8 : i32
    %7 = arith.muli %arg1, %c8_i32_4 : i32
    %c8_i32_5 = arith.constant 8 : i32
    %8 = arith.addi %7, %c8_i32_5 : i32
    %9 = arith.cmpi slt, %6, %8 : i32
    %c8_i32_6 = arith.constant 8 : i32
    %10 = arith.addi %6, %c8_i32_6 : i32
    %11 = arith.cmpi slt, %7, %10 : i32
    %12 = arith.andi %9, %11 : i1
    %13 = arith.extui %12 : i1 to i32
    %c0_i32_7 = arith.constant 0 : i32
    %14 = arith.cmpi ne, %13, %c0_i32_7 : i32
    scf.if %14 {
      %21 = tpu.iota {dimensions = array<i32: 0>} : vector<8x8xi32>
      %22 = vector.broadcast %6 : i32 to vector<8x8xi32>
      %23 = arith.addi %22, %21 : vector<8x8xi32>
      %24 = tpu.iota {dimensions = array<i32: 1>} : vector<8x8xi32>
      %25 = vector.broadcast %7 : i32 to vector<8x8xi32>
      %26 = arith.addi %25, %24 : vector<8x8xi32>
      %27 = arith.cmpi eq, %26, %23 : vector<8x8xi32>
      %cst_11 = arith.constant -1.000000e+30 : f32
      %28 = vector.broadcast %cst_11 : f32 to vector<8x8xf32>
      %29 = arith.select %27, %28, %5 : vector<8x8xi1>, vector<8x8xf32>
      %cst_12 = arith.constant dense<0xFF800000> : vector<8xf32>
      %30 = vector.multi_reduction <maximumf>, %29, %cst_12 [1] : vector<8x8xf32> to vector<8xf32>
      %31 = vector.shape_cast %30 : vector<8xf32> to vector<8x1xf32>
      %c0_13 = arith.constant 0 : index
      %c0_14 = arith.constant 0 : index
      %32 = vector.load %arg6[%c0_13, %c0_14] : memref<8x1xf32, #tpu.memory_space<vmem>>, vector<8x1xf32>
      %33 = arith.maximumf %32, %31 : vector<8x1xf32>
      %c0_15 = arith.constant 0 : index
      %c0_16 = arith.constant 0 : index
      %34 = vector.load %arg6[%c0_15, %c0_16] : memref<8x1xf32, #tpu.memory_space<vmem>>, vector<8x1xf32>
      %35 = arith.subf %34, %33 : vector<8x1xf32>
      %36 = math.exp %35 : vector<8x1xf32>
      %c0_17 = arith.constant 0 : index
      %c0_18 = arith.constant 0 : index
      %37 = vector.load %arg7[%c0_17, %c0_18] : memref<8x1xf32, #tpu.memory_space<vmem>>, vector<8x1xf32>
      %38 = arith.mulf %36, %37 : vector<8x1xf32>
      %39 = vector.broadcast %33 : vector<8x1xf32> to vector<8x8xf32>
      %40 = arith.subf %29, %39 : vector<8x8xf32>
      %41 = math.exp %40 : vector<8x8xf32>
      %cst_19 = arith.constant dense<0.000000e+00> : vector<8xf32>
      %42 = vector.multi_reduction <add>, %41, %cst_19 [1] : vector<8x8xf32> to vector<8xf32>
      %43 = vector.shape_cast %42 : vector<8xf32> to vector<8x1xf32>
      %44 = arith.addf %38, %43 : vector<8x1xf32>
      %c0_20 = arith.constant 0 : index
      %c0_21 = arith.constant 0 : index
      %45 = vector.load %arg7[%c0_20, %c0_21] : memref<8x1xf32, #tpu.memory_space<vmem>>, vector<8x1xf32>
      tpu.vector_store %arg7[%c0_20, %c0_21], %44 {strides = array<i32>} : memref<8x1xf32, #tpu.memory_space<vmem>>, vector<8x1xf32>,
      %c0_22 = arith.constant 0 : index
      %c0_23 = arith.constant 0 : index
      %46 = vector.load %arg6[%c0_22, %c0_23] : memref<8x1xf32, #tpu.memory_space<vmem>>, vector<8x1xf32>
      tpu.vector_store %arg6[%c0_22, %c0_23], %33 {strides = array<i32>} : memref<8x1xf32, #tpu.memory_space<vmem>>, vector<8x1xf32>,
    } else {
    }
    %true = arith.constant true
    %15 = arith.xori %12, %true : i1
    %16 = arith.extui %15 : i1 to i32
    %c0_i32_8 = arith.constant 0 : i32
    %17 = arith.cmpi ne, %16, %c0_i32_8 : i32
    scf.if %17 {
      %cst_11 = arith.constant dense<0xFF800000> : vector<8xf32>
      %21 = vector.multi_reduction <maximumf>, %5, %cst_11 [1] : vector<8x8xf32> to vector<8xf32>
      %22 = vector.shape_cast %21 : vector<8xf32> to vector<8x1xf32>
      %c0_12 = arith.constant 0 : index
      %c0_13 = arith.constant 0 : index
      %23 = vector.load %arg6[%c0_12, %c0_13] : memref<8x1xf32, #tpu.memory_space<vmem>>, vector<8x1xf32>
      %24 = arith.maximumf %23, %22 : vector<8x1xf32>
      %c0_14 = arith.constant 0 : index
      %c0_15 = arith.constant 0 : index
      %25 = vector.load %arg6[%c0_14, %c0_15] : memref<8x1xf32, #tpu.memory_space<vmem>>, vector<8x1xf32>
      %26 = arith.subf %25, %24 : vector<8x1xf32>
      %27 = math.exp %26 : vector<8x1xf32>
      %c0_16 = arith.constant 0 : index
      %c0_17 = arith.constant 0 : index
      %28 = vector.load %arg7[%c0_16, %c0_17] : memref<8x1xf32, #tpu.memory_space<vmem>>, vector<8x1xf32>
      %29 = arith.mulf %27, %28 : vector<8x1xf32>
      %30 = vector.broadcast %24 : vector<8x1xf32> to vector<8x8xf32>
      %31 = arith.subf %5, %30 : vector<8x8xf32>
      %32 = math.exp %31 : vector<8x8xf32>
      %cst_18 = arith.constant dense<0.000000e+00> : vector<8xf32>
      %33 = vector.multi_reduction <add>, %32, %cst_18 [1] : vector<8x8xf32> to vector<8xf32>
      %34 = vector.shape_cast %33 : vector<8xf32> to vector<8x1xf32>
      %35 = arith.addf %29, %34 : vector<8x1xf32>
      %c0_19 = arith.constant 0 : index
      %c0_20 = arith.constant 0 : index
      %36 = vector.load %arg7[%c0_19, %c0_20] : memref<8x1xf32, #tpu.memory_space<vmem>>, vector<8x1xf32>
      tpu.vector_store %arg7[%c0_19, %c0_20], %35 {strides = array<i32>} : memref<8x1xf32, #tpu.memory_space<vmem>>, vector<8x1xf32>,
      %c0_21 = arith.constant 0 : index
      %c0_22 = arith.constant 0 : index
      %37 = vector.load %arg6[%c0_21, %c0_22] : memref<8x1xf32, #tpu.memory_space<vmem>>, vector<8x1xf32>
      tpu.vector_store %arg6[%c0_21, %c0_22], %24 {strides = array<i32>} : memref<8x1xf32, #tpu.memory_space<vmem>>, vector<8x1xf32>,
    } else {
    }
    %c0_i32_9 = arith.constant 0 : i32
    %18 = arith.cmpi eq, %arg1, %c0_i32_9 : i32
    %19 = arith.extui %18 : i1 to i32
    %c0_i32_10 = arith.constant 0 : i32
    %20 = arith.cmpi ne, %19, %c0_i32_10 : i32
    scf.if %20 {
      %c0_11 = arith.constant 0 : index
      %c0_12 = arith.constant 0 : index
      %21 = vector.load %arg6[%c0_11, %c0_12] : memref<8x1xf32, #tpu.memory_space<vmem>>, vector<8x1xf32>
      %c0_13 = arith.constant 0 : index
      %c0_14 = arith.constant 0 : index
      %22 = vector.load %arg7[%c0_13, %c0_14] : memref<8x1xf32, #tpu.memory_space<vmem>>, vector<8x1xf32>
      %23 = math.log %22 : vector<8x1xf32>
      %24 = arith.addf %21, %23 : vector<8x1xf32>
      %c0_15 = arith.constant 0 : index
      %c0_16 = arith.constant 0 : index
      %25 = vector.load %arg4[%c0_15, %c0_16] : memref<8x1xf32, #tpu.memory_space<vmem>>, vector<8x1xf32>
      tpu.vector_store %arg4[%c0_15, %c0_16], %24 {strides = array<i32>} : memref<8x1xf32, #tpu.memory_space<vmem>>, vector<8x1xf32>,
    } else {
    }
    return
  }
  func.func @transform_0(%arg0: i32, %arg1: i32) -> (i32, i32) {
    %c0_i32 = arith.constant 0 : i32
    %c0_i32_0 = arith.constant 0 : i32
    return %arg0, %c0_i32 : i32, i32
  }
  func.func @transform_1(%arg0: i32, %arg1: i32) -> (i32, i32) {
    %c0_i32 = arith.constant 0 : i32
    %c0_i32_0 = arith.constant 0 : i32
    return %arg1, %c0_i32 : i32, i32
  }
  func.func @transform_2(%arg0: i32, %arg1: i32) -> (i32, i32) {
    %c0_i32 = arith.constant 0 : i32
    %c0_i32_0 = arith.constant 0 : i32
    return %arg0, %c0_i32 : i32, i32
  }
}

</mosaic_0001>

<llo_original>
// kernel: tpu_custom_call.1
$region0: #{tpu_custom_call.1}
  #allocation0 [shape = 'u32[]', space=smem, size = 0x4, offset = 0x4, fixed_abs, tag = 'smem constant byte address 0x4 - core index']
  #allocation1 [shape = 'u32[144,128]{1,0:T(1,128)}', space=vmem, size = 0x12000, scoped, tag = 'internal scratch']
  #allocation2 [shape = 'f32[8,128]{1,0:T(8,128)}', space=vmem, size = 0x1000, scoped, tag = 'scratch operand']
  #allocation3 [shape = 'f32[8,1]{1,0:T(8,128)}', space=vmem, size = 0x1000, scoped, tag = 'scratch operand']
  #allocation4 [shape = 'f32[8,1]{1,0:T(8,128)}', space=vmem, size = 0x1000, scoped, tag = 'scratch operand']
  %s0 = inlined_call_operand.hbm [shape: f32[8,128], index: 0, kind: input, shape index: {}]
  %s1 = inlined_call_operand.hbm [shape: f32[8,128], index: 1, kind: input, shape index: {}]
  %s2 = inlined_call_operand.vmem [shape: f32[8,1], index: 2, kind: output, shape index: {}]
  %s3 = sld [smem:[#allocation0]]
  $region42: #{tpu_custom_call.1} parent=0
    _
  %s5 = ssub.s32 1, %s3
  %s6 = scalar_select 0, %s5, %s3
  $region1: #{tpu_custom_call.1} parent=0
    #allocation5 [shape = 'u8[4096]{0}', space=vmem, size = 0x1000, scoped, tag = 'input window, operand 0, single buffered']
    #allocation6 [shape = 's32[1]{0}', space=sflag, size = 0x4, scoped, tag = 'scoped memory for tpu_custom_call.1']
    #allocation7 [shape = 'u8[4096]{0}', space=vmem, size = 0x1000, scoped, tag = 'input window, operand 1, single buffered']
    #allocation8 [shape = 's32[1]{0}', space=sflag, size = 0x4, scoped, tag = 'scoped memory for tpu_custom_call.1']
    %7 = vsyncpa [#allocation6], 0
    %8 = vsyncpa [#allocation8], 0
    // Predicated region
    $region2: #{tpu_custom_call.1} parent=1 // pred_check
      _
    $region3: #{tpu_custom_call.1} parent=1 // pred_check_branch
      %10 = sbr.rel (0) target = $region5
    $region4: #{tpu_custom_call.1} parent=1 // pred_region
      %s12 = ssub.s32 128, 128
      %13 = vsyncadd [#allocation6], %s12
      %s15 = sshll.u32 [#allocation5], 4
      %s16 = int_to_ptr.vmem [resolvable:$true] %s15
      %18 = dma.hbm_to_vmem [thread:$0]  %s0, 128, %s16, [#allocation6]
    $region5: #{tpu_custom_call.1} parent=1 // pred_fallthru
      _
    // Predicated region
    $region6: #{tpu_custom_call.1} parent=1 // pred_check
      _
    $region7: #{tpu_custom_call.1} parent=1 // pred_check_branch
      %20 = sbr.rel (0) target = $region9
    $region8: #{tpu_custom_call.1} parent=1 // pred_region
      %s22 = ssub.s32 128, 128
      %23 = vsyncadd [#allocation8], %s22
      %s25 = sshll.u32 [#allocation7], 4
      %s26 = int_to_ptr.vmem [resolvable:$true] %s25
      %28 = dma.hbm_to_vmem [thread:$0]  %s1, 128, %s26, [#allocation8]
    $region9: #{tpu_custom_call.1} parent=1 // pred_fallthru
      _
    // Predicated region
    $region10: #{tpu_custom_call.1} parent=1 // pred_check
      _
    $region11: #{tpu_custom_call.1} parent=1 // pred_check_branch
      %30 = sbr.rel (0) target = $region13
    $region12: #{tpu_custom_call.1} parent=1 // pred_region
      %31 = dma.done [#allocation6], 128
    $region13: #{tpu_custom_call.1} parent=1 // pred_fallthru
      _
    // Predicated region
    $region14: #{tpu_custom_call.1} parent=1 // pred_check
      _
    $region15: #{tpu_custom_call.1} parent=1 // pred_check_branch
      %33 = sbr.rel (0) target = $region17
    $region16: #{tpu_custom_call.1} parent=1 // pred_region
      %34 = dma.done [#allocation8], 128
    $region17: #{tpu_custom_call.1} parent=1 // pred_fallthru
      _
    %p35 = scmp.eq.s32.totalorder 0, 0
    // Predicated region
    $region18: #{tpu_custom_call.1} parent=1 // pred_check
      %p36 = pneg %p35
    $region19: #{tpu_custom_call.1} parent=1 // pred_check_branch
      %38 = sbr.rel (%p36) target = $region21
    $region20: #{tpu_custom_call.1} parent=1 // pred_region
      %v39 = vld [vmem:[#allocation5] sm:$0xff]
      %v40 = vmul.f32 %v39, 10.0
      %41 = vst [vmem:[#allocation2] sm:$0xff] %v40
      %vm42 = vcmask 7168
      %43 = vst.msk [vmem:[#allocation3] sm:$0xff] %vm42, -1e+30
      %44 = vst.msk [vmem:[#allocation4] sm:$0xff] %vm42, 0.0
    $region21: #{tpu_custom_call.1} parent=1 // pred_fallthru
      _
    %v45 = vld [vmem:[#allocation2] sm:$0xff]
    %v46 = vld [vmem:[#allocation7] sm:$0xff]
    %47 = vmatprep.subr.mxu0 0.0
    %48 = vmatpush1.xpose.msra.mxu0 %v46
    %49 = vmatprep.subr.mxu0 0.0
    %50 = vmatpush1.xpose.msra.mxu0 0.0
    %51 = vmatprep.subr.mxu0 0.0
    %52 = vmatpush1.xpose.msra.mxu0 0.0
    %53 = vmatprep.subr.mxu0 0.0
    %54 = vmatpush1.xpose.msra.mxu0 0.0
    %55 = vmatprep.subr.mxu0 0.0
    %56 = vmatpush1.xpose.msra.mxu0 0.0
    %57 = vmatprep.subr.mxu0 0.0
    %58 = vmatpush1.xpose.msra.mxu0 0.0
    %59 = vmatprep.subr.mxu0 0.0
    %60 = vmatpush1.xpose.msra.mxu0 0.0
    %61 = vmatprep.subr.mxu0 0.0
    %62 = vmatpush1.xpose.msra.mxu0 0.0
    %63 = vmatprep.subr.mxu0 0.0
    %64 = vmatpush1.xpose.msra.mxu0 0.0
    %65 = vmatprep.subr.mxu0 0.0
    %66 = vmatpush1.xpose.msra.mxu0 0.0
    %67 = vmatprep.subr.mxu0 0.0
    %68 = vmatpush1.xpose.msra.mxu0 0.0
    %69 = vmatprep.subr.mxu0 0.0
    %70 = vmatpush1.xpose.msra.mxu0 0.0
    %71 = vmatprep.subr.mxu0 0.0
    %72 = vmatpush1.xpose.msra.mxu0 0.0
    %73 = vmatprep.subr.mxu0 0.0
    %74 = vmatpush1.xpose.msra.mxu0 0.0
    %75 = vmatprep.subr.mxu0 0.0
    %76 = vmatpush1.xpose.msra.mxu0 0.0
    %77 = vmatprep.subr.mxu0 0.0
    %78 = vmatpush1.xpose.msra.mxu0 0.0
    %79 = vmatprep.subr.mxu0 0.0
    %80 = vmatpush1.xpose.msra.mxu0 0.0
    %81 = vmatprep.subr.mxu0 0.0
    %82 = vmatpush1.xpose.msra.mxu0 0.0
    %83 = vmatprep.subr.mxu0 0.0
    %84 = vmatpush1.xpose.msra.mxu0 0.0
    %85 = vmatprep.subr.mxu0 0.0
    %86 = vmatpush1.xpose.msra.mxu0 0.0
    %87 = vmatprep.subr.mxu0 0.0
    %88 = vmatpush1.xpose.msra.mxu0 0.0
    %89 = vmatprep.subr.mxu0 0.0
    %90 = vmatpush1.xpose.msra.mxu0 0.0
    %91 = vmatprep.subr.mxu0 0.0
    %92 = vmatpush1.xpose.msra.mxu0 0.0
    %93 = vmatprep.subr.mxu0 0.0
    %94 = vmatpush1.xpose.msra.mxu0 0.0
    %95 = vmatprep.subr.mxu0 0.0
    %96 = vmatpush1.xpose.msra.mxu0 0.0
    %97 = vmatprep.subr.mxu0 0.0
    %98 = vmatpush1.xpose.msra.mxu0 0.0
    %99 = vmatprep.subr.mxu0 0.0
    %100 = vmatpush1.xpose.msra.mxu0 0.0
    %101 = vmatprep.subr.mxu0 0.0
    %102 = vmatpush1.xpose.msra.mxu0 0.0
    %103 = vmatprep.subr.mxu0 0.0
    %104 = vmatpush1.xpose.msra.mxu0 0.0
    %105 = vmatprep.subr.mxu0 0.0
    %106 = vmatpush1.xpose.msra.mxu0 0.0
    %107 = vmatprep.subr.mxu0 0.0
    %108 = vmatpush1.xpose.msra.mxu0 0.0
    %109 = vmatprep.subr.mxu0 0.0
    %110 = vmatpush1.xpose.msra.mxu0 0.0
    %111 = vmatprep.mubr.f32.mxu0 0.0
    %112 = vmatmul.mubr.f32.gmra.mrb[0].mxu0 %v45
    %v113 = vpop.f32.mrb[0].mxu0
    %v114 = vadd.f32 0.0, %v113
    %v115 = vpop.f32.mrb[0].mxu0
    %116 = vdwg.mxu0
    %s117 = smul.u32 0, 8
    %s118 = smul.u32 0, 8
    %s119 = sadd.s32 %s118, 8
    %p120 = scmp.lt.s32.totalorder %s117, %s119
    %s121 = sadd.s32 %s117, 8
    %p122 = scmp.lt.s32.totalorder %s118, %s121
    %p123 = pnand %p120, %p122
    %p124 = pneg %p123
    // Predicated region
    $region22: #{tpu_custom_call.1} parent=1 // pred_check
      _
    $region23: #{tpu_custom_call.1} parent=1 // pred_check_branch
      %126 = sbr.rel (%p123) target = $region25
    $region24: #{tpu_custom_call.1} parent=1 // pred_region
      %v127 = vlaneseq
      %v128 = vshrl.u32 %v127, 7
      %v129 = vstv %s117
      %v130 = vadd.s32 %v129, %v128
      %v131 = vlaneseq
      %v132 = vand.u32 %v131, 127
      %v133 = vstv %s118
      %v134 = vadd.s32 %v133, %v132
      %vm135 = vcmp.eq.s32.totalorder %v134, %v130
      %v136 = vsel %vm135, -1e+30, %v114
      %vm137 = vcmask 64512
      %v138 = vsel %vm137, %v136, -inf
      %139 = vmax.xlane.f32.xlu0 %v138
      %v140 = vpop.xlane.xlu0 %139
      %v141 = vld [vmem:[#allocation3] sm:$0xff]
      %v142 = vmax.f32 %v141, %v140
      %v143 = vsub.f32 %v141, %v142
      %v144 = vmul.f32 %v143, 1.442695
      %v145 = vpow.pop %v144
      %v146 = vld [vmem:[#allocation4] sm:$0xff]
      %v147 = vmul.f32 %v145, %v146
      %149 = vset.pattern.permute.xlu0 0
      %150 = vperm.xlu0 %149, %v142
      %v151 = vpop.permute.xlu0 %150
      %v153 = vsub.f32 %v136, %v151
      %v154 = vmul.f32 %v153, 1.442695
      %v155 = vpow.pop %v154
      %v156 = vsel %vm137, %v155, 0.0
      %157 = vadd.xlane.f32.xlu0 %v156
      %v158 = vpop.xlane.xlu0 %157
      %v159 = vadd.f32 %v147, %v158
      %vm160 = vcmask 7168
      %161 = vst.msk [vmem:[#allocation4] sm:$0xff] %vm160, %v159
      %162 = vst.msk [vmem:[#allocation3] sm:$0xff] %vm160, %v142
    $region25: #{tpu_custom_call.1} parent=1 // pred_fallthru
      _
    %p163 = pneg %p124
    // Predicated region
    $region26: #{tpu_custom_call.1} parent=1 // pred_check
      _
    $region27: #{tpu_custom_call.1} parent=1 // pred_check_branch
      %165 = sbr.rel (%p124) target = $region29
    $region28: #{tpu_custom_call.1} parent=1 // pred_region
      %vm166 = vcmask 64512
      %v167 = vsel %vm166, %v114, -inf
      %168 = vmax.xlane.f32.xlu0 %v167
      %v169 = vpop.xlane.xlu0 %168
      %v170 = vld [vmem:[#allocation3] sm:$0xff]
      %v171 = vmax.f32 %v170, %v169
      %v172 = vsub.f32 %v170, %v171
      %v173 = vmul.f32 %v172, 1.442695
      %v174 = vpow.pop %v173
      %v175 = vld [vmem:[#allocation4] sm:$0xff]
      %v176 = vmul.f32 %v174, %v175
      %178 = vset.pattern.permute.xlu0 0
      %179 = vperm.xlu0 %178, %v171
      %v180 = vpop.permute.xlu0 %179
      %v182 = vsub.f32 %v114, %v180
      %v183 = vmul.f32 %v182, 1.442695
      %v184 = vpow.pop %v183
      %v185 = vsel %vm166, %v184, 0.0
      %186 = vadd.xlane.f32.xlu0 %v185
      %v187 = vpop.xlane.xlu0 %186
      %v188 = vadd.f32 %v176, %v187
      %vm189 = vcmask 7168
      %190 = vst.msk [vmem:[#allocation4] sm:$0xff] %vm189, %v188
      %191 = vst.msk [vmem:[#allocation3] sm:$0xff] %vm189, %v171
    $region29: #{tpu_custom_call.1} parent=1 // pred_fallthru
      _
    // Predicated region
    $region30: #{tpu_custom_call.1} parent=1 // pred_check
      %p192 = pneg %p35
    $region31: #{tpu_custom_call.1} parent=1 // pred_check_branch
      %194 = sbr.rel (%p192) target = $region33
    $region32: #{tpu_custom_call.1} parent=1 // pred_region
      %v195 = vld [vmem:[#allocation3] sm:$0xff]
      %v196 = vld [vmem:[#allocation4] sm:$0xff]
      %v197 = vlog2.pop %v196
      %v198 = vmul.f32 %v197, 0.6931472
      %v199 = vadd.f32 %v195, %v198
      %vm200 = vcmask 7168
      %201 = vst.msk [vmem:[%s2] sm:$0xff] %vm200, %v199
    $region33: #{tpu_custom_call.1} parent=1 // pred_fallthru
      _
    // Predicated region
    $region34: #{tpu_custom_call.1} parent=1 // pred_check
      _
    $region35: #{tpu_custom_call.1} parent=1 // pred_check_branch
      %203 = sbr.rel (0) target = $region37
    $region36: #{tpu_custom_call.1} parent=1 // pred_region
      _
    $region37: #{tpu_custom_call.1} parent=1 // pred_fallthru
      _
    // Predicated region
    $region38: #{tpu_custom_call.1} parent=1 // pred_check
      _
    $region39: #{tpu_custom_call.1} parent=1 // pred_check_branch
      %205 = sbr.rel (0) target = $region41
    $region40: #{tpu_custom_call.1} parent=1 // pred_region
      _
    $region41: #{tpu_custom_call.1} parent=1 // pred_fallthru
      _
    %206 = vsyncpa [#allocation6], 1
    %207 = vsyncpa [#allocation8], 1

</llo_original>
